<compile_context>
chip_gen: v7x
topology: tpu7x:2x2x1
jax: 0.10.0
libtpu: 0.0.40
codegen_flags: <defaults>
</compile_context>

<pallas_src>
import numpy as np
import jax
import jax.numpy as jnp
from jax import lax
from jax.experimental import pallas as pl
from jax.experimental.pallas import tpu as pltpu


def gcn_layer_kernel(adj_ref, norm_ref, feats_ref,
                     w_msg_ref, b_msg_ref, w_skip_ref, b_skip_ref,
                     out_ref):
    """Fused GCN layer.

    adj_ref    : (N, N)      dense adjacency, adj[dst, src] = #edges src->dst
    norm_ref   : (N, 1)      deg^{-1/2} (out-degree based, inf -> 0)
    feats_ref  : (N, Din)
    w_msg_ref  : (Dout, Din) ; b_msg_ref : (1, Dout)
    w_skip_ref : (Dout, Din) ; b_skip_ref: (1, Dout)
    out_ref    : (N, Dout)
    """
    feats = feats_ref[...]
    nrm = norm_ref[...]

    # Source-side normalization, then message passing (copy_u + sum) as a
    # dense matmul on the MXU: rst[v] = sum_u adj[v, u] * feat_src[u].
    feat_src = feats * nrm
    agg = jnp.dot(adj_ref[...], feat_src, preferred_element_type=jnp.float32)
    rst = agg * nrm  # destination-side normalization

    # F.linear(x, W, b) == x @ W.T + b.  Contract axis 1 of both operands so
    # no transpose of W is materialized in-kernel (review item #1).
    dn = (((1,), (1,)), ((), ()))
    msg = lax.dot_general(rst, w_msg_ref[...], dn,
                          preferred_element_type=jnp.float32)
    skip = lax.dot_general(feats, w_skip_ref[...], dn,
                           preferred_element_type=jnp.float32)

    out_ref[...] = msg + b_msg_ref[...] + skip + b_skip_ref[...]


def gcn_layer_forward(src, dst, num_nodes, feats,
                      w_msg, b_msg, w_skip, b_skip):
    """Wrapper: graph preprocessing + one fused pallas_call."""
    n = int(num_nodes)
    dim_out, _ = w_msg.shape

    # Graph-structure preprocessing (the DGL / scatter_add part of the module):
    # out-degree based GCN norm and a dense adjacency adj[dst, src].
    # TODO(synk): for large sparse graphs this dense adjacency should become a
    # block-sparse / gather-based aggregation instead of an (N, N) matmul.
    ones = jnp.ones(src.shape, jnp.float32)
    deg = jnp.zeros((n,), jnp.float32).at[src].add(ones)            # out-degree
    norm = jnp.where(deg > 0, lax.rsqrt(deg), 0.0).reshape(n, 1)    # inf -> 0
    adj = jnp.zeros((n, n), jnp.float32).at[dst, src].add(1.0)

    vmem = pl.BlockSpec(memory_space=pltpu.MemorySpace.VMEM)
    out = pl.pallas_call(
        gcn_layer_kernel,
        out_shape=jax.ShapeDtypeStruct((n, dim_out), jnp.float32),
        in_specs=[vmem] * 7,
        out_specs=vmem,
    )(adj, norm, feats.astype(jnp.float32),
      w_msg.astype(jnp.float32), b_msg.reshape(1, dim_out).astype(jnp.float32),
      w_skip.astype(jnp.float32), b_skip.reshape(1, dim_out).astype(jnp.float32))
    return out


if __name__ == "__main__":
    # Small, lane-friendly shapes: 16 nodes, 48 random edges, 128-dim features.
    N, DIM_IN, DIM_OUT, E = 16, 128, 128, 48

    key = jax.random.PRNGKey(0)
    k_feat, k_src, k_dst, k_wm, k_ws, k_bm, k_bs = jax.random.split(key, 7)

    feats = jax.random.normal(k_feat, (N, DIM_IN), dtype=jnp.float32)
    src = jax.random.randint(k_src, (E,), 0, N)
    dst = jax.random.randint(k_dst, (E,), 0, N)

    # Parameters (xavier_normal_ with relu gain, as in reset_parameters).
    gain = np.sqrt(2.0)
    std = gain * np.sqrt(2.0 / (DIM_IN + DIM_OUT))
    w_msg = std * jax.random.normal(k_wm, (DIM_OUT, DIM_IN), dtype=jnp.float32)
    w_skip = std * jax.random.normal(k_ws, (DIM_OUT, DIM_IN), dtype=jnp.float32)
    # Module init zeros the biases; use small nonzero values here to exercise
    # the bias-add path (forward accepts arbitrary fast_weights anyway).
    b_msg = 0.1 * jax.random.normal(k_bm, (DIM_OUT,), dtype=jnp.float32)
    b_skip = 0.1 * jax.random.normal(k_bs, (DIM_OUT,), dtype=jnp.float32)

    out = gcn_layer_forward(src, dst, N, feats, w_msg, b_msg, w_skip, b_skip)
    out = jax.block_until_ready(out)

    # Pure-JAX reference using edge-wise copy_u + segment-sum message passing
    # (an independent path from the dense-adjacency matmul in the kernel).
    deg = jnp.zeros((N,), jnp.float32).at[src].add(1.0)
    norm = jnp.where(deg > 0, 1.0 / jnp.sqrt(deg), 0.0)
    feat_src = feats * norm[:, None]
    msgs = feat_src[src]                                     # copy_u
    rst = jax.ops.segment_sum(msgs, dst, num_segments=N)     # sum reduce
    rst = rst * norm[:, None]
    ref = rst @ w_msg.T + b_msg + feats @ w_skip.T + b_skip

    np.testing.assert_allclose(np.asarray(out), np.asarray(ref),
                               rtol=1e-5, atol=1e-4)
    print("KERNEL_OK")
</pallas_src>

<mosaic_0001>
module attributes {stable_mosaic.version = 11 : i64} {
  func.func @gcn_layer_kernel(%arg0: memref<16x16xf32, #tpu.memory_space<vmem>>, %arg1: memref<16x1xf32, #tpu.memory_space<vmem>>, %arg2: memref<16x128xf32, #tpu.memory_space<vmem>>, %arg3: memref<128x128xf32, #tpu.memory_space<vmem>>, %arg4: memref<1x128xf32, #tpu.memory_space<vmem>>, %arg5: memref<128x128xf32, #tpu.memory_space<vmem>>, %arg6: memref<1x128xf32, #tpu.memory_space<vmem>>, %arg7: memref<16x128xf32, #tpu.memory_space<vmem>>) attributes {dimension_semantics = [], scalar_prefetch = 0 : i64, scratch_operands = 0 : i64, tpu.core_type = #tpu.core_type<tc>} {
    %c0 = arith.constant 0 : index
    %c0_0 = arith.constant 0 : index
    %0 = vector.load %arg2[%c0, %c0_0] : memref<16x128xf32, #tpu.memory_space<vmem>>, vector<16x128xf32>
    %c0_1 = arith.constant 0 : index
    %c0_2 = arith.constant 0 : index
    %1 = vector.load %arg1[%c0_1, %c0_2] : memref<16x1xf32, #tpu.memory_space<vmem>>, vector<16x1xf32>
    %2 = vector.broadcast %1 : vector<16x1xf32> to vector<16x128xf32>
    %3 = arith.mulf %0, %2 : vector<16x128xf32>
    %c0_3 = arith.constant 0 : index
    %c0_4 = arith.constant 0 : index
    %4 = vector.load %arg0[%c0_3, %c0_4] : memref<16x16xf32, #tpu.memory_space<vmem>>, vector<16x16xf32>
    %cst = arith.constant dense<0.000000e+00> : vector<16x128xf32>
    %5 = tpu.matmul %4, %3, %cst {dimension_numbers = #tpu.dot_dimension_numbers<[1], [0], [0], [1], [0, 0, 1, 1], [], []>} : vector<16x16xf32>, vector<16x128xf32>, vector<16x128xf32> -> vector<16x128xf32>
    %6 = vector.broadcast %1 : vector<16x1xf32> to vector<16x128xf32>
    %7 = arith.mulf %5, %6 : vector<16x128xf32>
    %c0_5 = arith.constant 0 : index
    %c0_6 = arith.constant 0 : index
    %8 = vector.load %arg3[%c0_5, %c0_6] : memref<128x128xf32, #tpu.memory_space<vmem>>, vector<128x128xf32>
    %cst_7 = arith.constant dense<0.000000e+00> : vector<16x128xf32>
    %9 = tpu.matmul %7, %8, %cst_7 {dimension_numbers = #tpu.dot_dimension_numbers<[1], [1], [0], [0], [0, 0, 1, 0], [], []>} : vector<16x128xf32>, vector<128x128xf32>, vector<16x128xf32> -> vector<16x128xf32>
    %c0_8 = arith.constant 0 : index
    %c0_9 = arith.constant 0 : index
    %10 = vector.load %arg5[%c0_8, %c0_9] : memref<128x128xf32, #tpu.memory_space<vmem>>, vector<128x128xf32>
    %cst_10 = arith.constant dense<0.000000e+00> : vector<16x128xf32>
    %11 = tpu.matmul %0, %10, %cst_10 {dimension_numbers = #tpu.dot_dimension_numbers<[1], [1], [0], [0], [0, 0, 1, 0], [], []>} : vector<16x128xf32>, vector<128x128xf32>, vector<16x128xf32> -> vector<16x128xf32>
    %c0_11 = arith.constant 0 : index
    %c0_12 = arith.constant 0 : index
    %12 = vector.load %arg4[%c0_11, %c0_12] : memref<1x128xf32, #tpu.memory_space<vmem>>, vector<1x128xf32>
    %13 = vector.broadcast %12 : vector<1x128xf32> to vector<16x128xf32>
    %14 = arith.addf %9, %13 : vector<16x128xf32>
    %15 = arith.addf %14, %11 : vector<16x128xf32>
    %c0_13 = arith.constant 0 : index
    %c0_14 = arith.constant 0 : index
    %16 = vector.load %arg6[%c0_13, %c0_14] : memref<1x128xf32, #tpu.memory_space<vmem>>, vector<1x128xf32>
    %17 = vector.broadcast %16 : vector<1x128xf32> to vector<16x128xf32>
    %18 = arith.addf %15, %17 : vector<16x128xf32>
    %c0_15 = arith.constant 0 : index
    %c0_16 = arith.constant 0 : index
    %19 = vector.load %arg7[%c0_15, %c0_16] : memref<16x128xf32, #tpu.memory_space<vmem>>, vector<16x128xf32>
    tpu.vector_store %arg7[%c0_15, %c0_16], %18 {strides = array<i32>} : memref<16x128xf32, #tpu.memory_space<vmem>>, vector<16x128xf32>,
    return
  }
}

</mosaic_0001>

<llo_original>
// kernel: tpu_custom_call.1
$region0: #{tpu_custom_call.1}
  #allocation0 [shape = 'u32[]', space=smem, size = 0x4, offset = 0x4, fixed_abs, tag = 'smem constant byte address 0x4 - core index']
  #allocation1 [shape = 'u32[144,128]{1,0:T(1,128)}', space=vmem, size = 0x12000, scoped, tag = 'internal scratch']
  %s0 = inlined_call_operand.vmem [shape: f32[16,16], index: 0, kind: input, shape index: {}]
  %s1 = inlined_call_operand.vmem [shape: f32[16,1], index: 1, kind: input, shape index: {}]
  %s2 = inlined_call_operand.hbm [shape: f32[16,128], index: 2, kind: input, shape index: {}]
  %s3 = inlined_call_operand.hbm [shape: f32[128,128], index: 3, kind: input, shape index: {}]
  %s4 = inlined_call_operand.vmem [shape: f32[1,128], index: 4, kind: input, shape index: {}]
  %s5 = inlined_call_operand.hbm [shape: f32[128,128], index: 5, kind: input, shape index: {}]
  %s6 = inlined_call_operand.vmem [shape: f32[1,128], index: 6, kind: input, shape index: {}]
  %s7 = inlined_call_operand.hbm [shape: f32[16,128], index: 7, kind: output, shape index: {}]
  %s8 = sld [smem:[#allocation0]]
  $region50: #{tpu_custom_call.1} parent=0
    _
  %s10 = ssub.s32 1, %s8
  %s11 = scalar_select 0, %s10, %s8
  $region1: #{tpu_custom_call.1} parent=0
    #allocation2 [shape = 'u8[8192]{0}', space=vmem, size = 0x2000, scoped, tag = 'input window, operand 2, single buffered']
    #allocation3 [shape = 's32[1]{0}', space=sflag, size = 0x4, scoped, tag = 'scoped memory for tpu_custom_call.1']
    #allocation4 [shape = 's32[1]{0}', space=sflag, size = 0x4, scoped, tag = 'scoped memory for tpu_custom_call.1']
    #allocation5 [shape = 'u8[65536]{0}', space=vmem, size = 0x10000, scoped, tag = 'input window, operand 3, single buffered']
    #allocation6 [shape = 's32[1]{0}', space=sflag, size = 0x4, scoped, tag = 'scoped memory for tpu_custom_call.1']
    #allocation7 [shape = 'u8[65536]{0}', space=vmem, size = 0x10000, scoped, tag = 'input window, operand 5, single buffered']
    #allocation8 [shape = 'u8[8192]{0}', space=vmem, size = 0x2000, scoped, tag = 'output window, operand 0, single buffered']
    %12 = vsyncpa [#allocation3], 0
    %13 = vsyncpa [#allocation6], 0
    %14 = vsyncpa [#allocation4], 0
    // Predicated region
    $region2: #{tpu_custom_call.1} parent=1 // pred_check
      _
    $region3: #{tpu_custom_call.1} parent=1 // pred_check_branch
      %16 = sbr.rel (0) target = $region5
    $region4: #{tpu_custom_call.1} parent=1 // pred_region
      _
    $region5: #{tpu_custom_call.1} parent=1 // pred_fallthru
      _
    // Predicated region
    $region6: #{tpu_custom_call.1} parent=1 // pred_check
      _
    $region7: #{tpu_custom_call.1} parent=1 // pred_check_branch
      %18 = sbr.rel (0) target = $region9
    $region8: #{tpu_custom_call.1} parent=1 // pred_region
      _
    $region9: #{tpu_custom_call.1} parent=1 // pred_fallthru
      _
    // Predicated region
    $region10: #{tpu_custom_call.1} parent=1 // pred_check
      _
    $region11: #{tpu_custom_call.1} parent=1 // pred_check_branch
      %20 = sbr.rel (0) target = $region13
    $region12: #{tpu_custom_call.1} parent=1 // pred_region
      %s22 = ssub.s32 256, 256
      %23 = vsyncadd [#allocation3], %s22
      %s24 = sshll.u32 [#allocation2], 4
      %s25 = int_to_ptr.vmem [resolvable:$true] %s24
      %30 = dma.hbm_to_vmem [thread:$0]  %s2, 256, %s25, [#allocation3], 128, 128, 8
    $region13: #{tpu_custom_call.1} parent=1 // pred_fallthru
      _
    // Predicated region
    $region14: #{tpu_custom_call.1} parent=1 // pred_check
      _
    $region15: #{tpu_custom_call.1} parent=1 // pred_check_branch
      %32 = sbr.rel (0) target = $region17
    $region16: #{tpu_custom_call.1} parent=1 // pred_region
      %s34 = ssub.s32 2048, 2048
      %35 = vsyncadd [#allocation6], %s34
      %s36 = sshll.u32 [#allocation5], 4
      %s37 = int_to_ptr.vmem [resolvable:$true] %s36
      %42 = dma.hbm_to_vmem [thread:$0]  %s3, 2048, %s37, [#allocation6], 128, 128, 8
    $region17: #{tpu_custom_call.1} parent=1 // pred_fallthru
      _
    // Predicated region
    $region18: #{tpu_custom_call.1} parent=1 // pred_check
      _
    $region19: #{tpu_custom_call.1} parent=1 // pred_check_branch
      %44 = sbr.rel (0) target = $region21
    $region20: #{tpu_custom_call.1} parent=1 // pred_region
      _
    $region21: #{tpu_custom_call.1} parent=1 // pred_fallthru
      _
    // Predicated region
    $region22: #{tpu_custom_call.1} parent=1 // pred_check
      _
    $region23: #{tpu_custom_call.1} parent=1 // pred_check_branch
      %46 = sbr.rel (0) target = $region25
    $region24: #{tpu_custom_call.1} parent=1 // pred_region
      %s48 = ssub.s32 2048, 2048
      %49 = vsyncadd [#allocation6], %s48
      %s50 = sshll.u32 [#allocation7], 4
      %s51 = int_to_ptr.vmem [resolvable:$true] %s50
      %56 = dma.hbm_to_vmem [thread:$0]  %s5, 2048, %s51, [#allocation6], 128, 128, 8
    $region25: #{tpu_custom_call.1} parent=1 // pred_fallthru
      _
    // Predicated region
    $region26: #{tpu_custom_call.1} parent=1 // pred_check
      _
    $region27: #{tpu_custom_call.1} parent=1 // pred_check_branch
      %58 = sbr.rel (0) target = $region29
    $region28: #{tpu_custom_call.1} parent=1 // pred_region
      _
    $region29: #{tpu_custom_call.1} parent=1 // pred_fallthru
      _
    // Predicated region
    $region30: #{tpu_custom_call.1} parent=1 // pred_check
      _
    $region31: #{tpu_custom_call.1} parent=1 // pred_check_branch
      %60 = sbr.rel (0) target = $region33
    $region32: #{tpu_custom_call.1} parent=1 // pred_region
      %61 = dma.done [#allocation3], 256
    $region33: #{tpu_custom_call.1} parent=1 // pred_fallthru
      _
    // Predicated region
    $region34: #{tpu_custom_call.1} parent=1 // pred_check
      _
    $region35: #{tpu_custom_call.1} parent=1 // pred_check_branch
      %63 = sbr.rel (0) target = $region37
    $region36: #{tpu_custom_call.1} parent=1 // pred_region
      %64 = dma.done [#allocation6], 2048
    $region37: #{tpu_custom_call.1} parent=1 // pred_fallthru
      _
    // Predicated region
    $region38: #{tpu_custom_call.1} parent=1 // pred_check
      _
    $region39: #{tpu_custom_call.1} parent=1 // pred_check_branch
      %66 = sbr.rel (0) target = $region41
    $region40: #{tpu_custom_call.1} parent=1 // pred_region
      %67 = dma.done [#allocation6], 2048
    $region41: #{tpu_custom_call.1} parent=1 // pred_fallthru
      _
    %v68 = vld [vmem:[#allocation2] sm:$0xff]
    %v69 = vld [vmem:[#allocation2 + $0x8] sm:$0xff]
    %v70 = vld [vmem:[%s1] sm:$0xff]
    %v71 = vld [vmem:[%s1 + $0x8] sm:$0xff]
    %73 = vset.pattern.permute.xlu0 0
    %74 = vperm.xlu0 %73, %v70
    %v75 = vpop.permute.xlu0 %74
    %78 = vset.pattern.permute.xlu0 0
    %79 = vperm.xlu0 %78, %v71
    %v80 = vpop.permute.xlu0 %79
    %v82 = vmul.f32 %v68, %v75
    %v83 = vmul.f32 %v69, %v80
    %v84 = vld [vmem:[%s0] sm:$0xff]
    %v85 = vld [vmem:[%s0 + $0x8] sm:$0xff]
    %vm86 = vcmask 130048
    %v88 = vsel %vm86, %v84, 0
    %v91 = vsel %vm86, %v85, 0
    %93 = vmatprep.subr.mxu0 0.0
    %94 = vmatpush1.msra.mxu0 %v82
    %95 = vmatprep.subr.mxu0 0.0
    %96 = vmatpush1.msra.mxu0 %v83
    %97 = vmatprep.subr.mxu0 0.0
    %98 = vmatpush1.msra.mxu0 0.0
    %99 = vmatprep.subr.mxu0 0.0
    %100 = vmatpush1.msra.mxu0 0.0
    %101 = vmatprep.subr.mxu0 0.0
    %102 = vmatpush1.msra.mxu0 0.0
    %103 = vmatprep.subr.mxu0 0.0
    %104 = vmatpush1.msra.mxu0 0.0
    %105 = vmatprep.subr.mxu0 0.0
    %106 = vmatpush1.msra.mxu0 0.0
    %107 = vmatprep.subr.mxu0 0.0
    %108 = vmatpush1.msra.mxu0 0.0
    %109 = vmatprep.subr.mxu0 0.0
    %110 = vmatpush1.msra.mxu0 0.0
    %111 = vmatprep.subr.mxu0 0.0
    %112 = vmatpush1.msra.mxu0 0.0
    %113 = vmatprep.subr.mxu0 0.0
    %114 = vmatpush1.msra.mxu0 0.0
    %115 = vmatprep.subr.mxu0 0.0
    %116 = vmatpush1.msra.mxu0 0.0
    %117 = vmatprep.subr.mxu0 0.0
    %118 = vmatpush1.msra.mxu0 0.0
    %119 = vmatprep.subr.mxu0 0.0
    %120 = vmatpush1.msra.mxu0 0.0
    %121 = vmatprep.subr.mxu0 0.0
    %122 = vmatpush1.msra.mxu0 0.0
    %123 = vmatprep.subr.mxu0 0.0
    %124 = vmatpush1.msra.mxu0 0.0
    %125 = vmatprep.subr.mxu0 0.0
    %126 = vmatpush1.msra.mxu0 0.0
    %127 = vmatprep.subr.mxu0 0.0
    %128 = vmatpush1.msra.mxu0 0.0
    %129 = vmatprep.subr.mxu0 0.0
    %130 = vmatpush1.msra.mxu0 0.0
    %131 = vmatprep.subr.mxu0 0.0
    %132 = vmatpush1.msra.mxu0 0.0
    %133 = vmatprep.subr.mxu0 0.0
    %134 = vmatpush1.msra.mxu0 0.0
    %135 = vmatprep.subr.mxu0 0.0
    %136 = vmatpush1.msra.mxu0 0.0
    %137 = vmatprep.subr.mxu0 0.0
    %138 = vmatpush1.msra.mxu0 0.0
    %139 = vmatprep.subr.mxu0 0.0
    %140 = vmatpush1.msra.mxu0 0.0
    %141 = vmatprep.subr.mxu0 0.0
    %142 = vmatpush1.msra.mxu0 0.0
    %143 = vmatprep.subr.mxu0 0.0
    %144 = vmatpush1.msra.mxu0 0.0
    %145 = vmatprep.subr.mxu0 0.0
    %146 = vmatpush1.msra.mxu0 0.0
    %147 = vmatprep.subr.mxu0 0.0
    %148 = vmatpush1.msra.mxu0 0.0
    %149 = vmatprep.subr.mxu0 0.0
    %150 = vmatpush1.msra.mxu0 0.0
    %151 = vmatprep.subr.mxu0 0.0
    %152 = vmatpush1.msra.mxu0 0.0
    %153 = vmatprep.subr.mxu0 0.0
    %154 = vmatpush1.msra.mxu0 0.0
    %155 = vmatprep.subr.mxu0 0.0
    %156 = vmatpush1.msra.mxu0 0.0
    %157 = vmatprep.mubr.f32.mxu0 0.0
    %158 = vmatmul.mubr.f32.gmra.mrb[0].mxu0 %v88
    %v159 = vpop.f32.mrb[0].mxu0
    %v160 = vadd.f32 0.0, %v159
    %v161 = vpop.f32.mrb[0].mxu0
    %162 = vmatprep.mubr.f32.mxu0 0.0
    %163 = vmatmul.mubr.f32.gmra.mrb[0].mxu0 %v91
    %v164 = vpop.f32.mrb[0].mxu0
    %v165 = vadd.f32 0.0, %v164
    %v166 = vpop.f32.mrb[0].mxu0
    %167 = vdwg.mxu0
    %v168 = vmul.f32 %v160, %v75
    %v169 = vmul.f32 %v165, %v80
    %v170 = vld [vmem:[#allocation5] sm:$0xff]
    %v171 = vld [vmem:[#allocation5 + $0x8] sm:$0xff]
    %v172 = vld [vmem:[#allocation5 + $0x10] sm:$0xff]
    %v173 = vld [vmem:[#allocation5 + $0x18] sm:$0xff]
    %v174 = vld [vmem:[#allocation5 + $0x20] sm:$0xff]
    %v175 = vld [vmem:[#allocation5 + $0x28] sm:$0xff]
    %v176 = vld [vmem:[#allocation5 + $0x30] sm:$0xff]
    %v177 = vld [vmem:[#allocation5 + $0x38] sm:$0xff]
    %v178 = vld [vmem:[#allocation5 + $0x40] sm:$0xff]
    %v179 = vld [vmem:[#allocation5 + $0x48] sm:$0xff]
    %v180 = vld [vmem:[#allocation5 + $0x50] sm:$0xff]
    %v181 = vld [vmem:[#allocation5 + $0x58] sm:$0xff]
    %v182 = vld [vmem:[#allocation5 + $0x60] sm:$0xff]
    %v183 = vld [vmem:[#allocation5 + $0x68] sm:$0xff]
    %v184 = vld [vmem:[#allocation5 + $0x70] sm:$0xff]
    %v185 = vld [vmem:[#allocation5 + $0x78] sm:$0xff]
    %v186 = vld [vmem:[#allocation7] sm:$0xff]
    %v187 = vld [vmem:[#allocation7 + $0x8] sm:$0xff]
    %v188 = vld [vmem:[#allocation7 + $0x10] sm:$0xff]
    %v189 = vld [vmem:[#allocation7 + $0x18] sm:$0xff]
    %v190 = vld [vmem:[#allocation7 + $0x20] sm:$0xff]
    %v191 = vld [vmem:[#allocation7 + $0x28] sm:$0xff]
    %v192 = vld [vmem:[#allocation7 + $0x30] sm:$0xff]
    %v193 = vld [vmem:[#allocation7 + $0x38] sm:$0xff]
    %v194 = vld [vmem:[#allocation7 + $0x40] sm:$0xff]
    %v195 = vld [vmem:[#allocation7 + $0x48] sm:$0xff]
    %v196 = vld [vmem:[#allocation7 + $0x50] sm:$0xff]
    %v197 = vld [vmem:[#allocation7 + $0x58] sm:$0xff]
    %v198 = vld [vmem:[#allocation7 + $0x60] sm:$0xff]
    %v199 = vld [vmem:[#allocation7 + $0x68] sm:$0xff]
    %v200 = vld [vmem:[#allocation7 + $0x70] sm:$0xff]
    %v201 = vld [vmem:[#allocation7 + $0x78] sm:$0xff]
    %202 = vmatprep.subr.mxu0 0.0
    %203 = vmatpush1.xpose.msra.mxu0 %v186
    %204 = vmatprep.subr.mxu0 0.0
    %205 = vmatpush1.xpose.msra.mxu0 %v187
    %206 = vmatprep.subr.mxu0 0.0
    %207 = vmatpush1.xpose.msra.mxu0 %v188
    %208 = vmatprep.subr.mxu0 0.0
    %209 = vmatpush1.xpose.msra.mxu0 %v189
    %210 = vmatprep.subr.mxu0 0.0
    %211 = vmatpush1.xpose.msra.mxu0 %v190
    %212 = vmatprep.subr.mxu0 0.0
    %213 = vmatpush1.xpose.msra.mxu0 %v191
    %214 = vmatprep.subr.mxu0 0.0
    %215 = vmatpush1.xpose.msra.mxu0 %v192
    %216 = vmatprep.subr.mxu0 0.0
    %217 = vmatpush1.xpose.msra.mxu0 %v193
    %218 = vmatprep.subr.mxu0 0.0
    %219 = vmatpush1.xpose.msra.mxu0 %v194
    %220 = vmatprep.subr.mxu0 0.0
    %221 = vmatpush1.xpose.msra.mxu0 %v195
    %222 = vmatprep.subr.mxu0 0.0
    %223 = vmatpush1.xpose.msra.mxu0 %v196
    %224 = vmatprep.subr.mxu0 0.0
    %225 = vmatpush1.xpose.msra.mxu0 %v197
    %226 = vmatprep.subr.mxu0 0.0
    %227 = vmatpush1.xpose.msra.mxu0 %v198
    %228 = vmatprep.subr.mxu0 0.0
    %229 = vmatpush1.xpose.msra.mxu0 %v199
    %230 = vmatprep.subr.mxu0 0.0
    %231 = vmatpush1.xpose.msra.mxu0 %v200
    %232 = vmatprep.subr.mxu0 0.0
    %233 = vmatpush1.xpose.msra.mxu0 %v201
    %234 = vmatprep.subr.mxu0 0.0
    %235 = vmatpush1.xpose.msra.mxu0 0.0
    %236 = vmatprep.subr.mxu0 0.0
    %237 = vmatpush1.xpose.msra.mxu0 0.0
    %238 = vmatprep.subr.mxu0 0.0
    %239 = vmatpush1.xpose.msra.mxu0 0.0
    %240 = vmatprep.subr.mxu0 0.0
    %241 = vmatpush1.xpose.msra.mxu0 0.0
    %242 = vmatprep.subr.mxu0 0.0
    %243 = vmatpush1.xpose.msra.mxu0 0.0
    %244 = vmatprep.subr.mxu0 0.0
    %245 = vmatpush1.xpose.msra.mxu0 0.0
    %246 = vmatprep.subr.mxu0 0.0
    %247 = vmatpush1.xpose.msra.mxu0 0.0
    %248 = vmatprep.subr.mxu0 0.0
    %249 = vmatpush1.xpose.msra.mxu0 0.0
    %250 = vmatprep.subr.mxu0 0.0
    %251 = vmatpush1.xpose.msra.mxu0 0.0
    %252 = vmatprep.subr.mxu0 0.0
    %253 = vmatpush1.xpose.msra.mxu0 0.0
    %254 = vmatprep.subr.mxu0 0.0
    %255 = vmatpush1.xpose.msra.mxu0 0.0
    %256 = vmatprep.subr.mxu0 0.0
    %257 = vmatpush1.xpose.msra.mxu0 0.0
    %258 = vmatprep.subr.mxu0 0.0
    %259 = vmatpush1.xpose.msra.mxu0 0.0
    %260 = vmatprep.subr.mxu0 0.0
    %261 = vmatpush1.xpose.msra.mxu0 0.0
    %262 = vmatprep.subr.mxu0 0.0
    %263 = vmatpush1.xpose.msra.mxu0 0.0
    %264 = vmatprep.subr.mxu0 0.0
    %265 = vmatpush1.xpose.msra.mxu0 0.0
    %266 = vmatprep.mubr.f32.mxu0 0.0
    %267 = vmatmul.mubr.f32.gmra.mrb[0].mxu0 %v68
    %v268 = vpop.f32.mrb[0].mxu0
    %v269 = vadd.f32 0.0, %v268
    %v270 = vpop.f32.mrb[0].mxu0
    %271 = vmatprep.mubr.f32.mxu0 0.0
    %272 = vmatmul.mubr.f32.gmra.mrb[0].mxu0 %v69
    %v273 = vpop.f32.mrb[0].mxu0
    %v274 = vadd.f32 0.0, %v273
    %v275 = vpop.f32.mrb[0].mxu0
    %276 = vdwg.mxu0
    %v277 = vld [vmem:[%s4] sm:$0x1]
    %v279 = vlaneseq
    %v280 = vshrl.u32 %v279, 7
    %v281 = vsub.s32 0, %v280
    %v282 = vrot.slane %v277, %v281
    %284 = vmatprep.subr.mxu0 0.0
    %285 = vmatpush1.xpose.msra.mxu0 %v170
    %286 = vmatprep.subr.mxu0 0.0
    %287 = vmatpush1.xpose.msra.mxu0 %v171
    %288 = vmatprep.subr.mxu0 0.0
    %289 = vmatpush1.xpose.msra.mxu0 %v172
    %290 = vmatprep.subr.mxu0 0.0
    %291 = vmatpush1.xpose.msra.mxu0 %v173
    %292 = vmatprep.subr.mxu0 0.0
    %293 = vmatpush1.xpose.msra.mxu0 %v174
    %294 = vmatprep.subr.mxu0 0.0
    %295 = vmatpush1.xpose.msra.mxu0 %v175
    %296 = vmatprep.subr.mxu0 0.0
    %297 = vmatpush1.xpose.msra.mxu0 %v176
    %298 = vmatprep.subr.mxu0 0.0
    %299 = vmatpush1.xpose.msra.mxu0 %v177
    %300 = vmatprep.subr.mxu0 0.0
    %301 = vmatpush1.xpose.msra.mxu0 %v178
    %302 = vmatprep.subr.mxu0 0.0
    %303 = vmatpush1.xpose.msra.mxu0 %v179
    %304 = vmatprep.subr.mxu0 0.0
    %305 = vmatpush1.xpose.msra.mxu0 %v180
    %306 = vmatprep.subr.mxu0 0.0
    %307 = vmatpush1.xpose.msra.mxu0 %v181
    %308 = vmatprep.subr.mxu0 0.0
    %309 = vmatpush1.xpose.msra.mxu0 %v182
    %310 = vmatprep.subr.mxu0 0.0
    %311 = vmatpush1.xpose.msra.mxu0 %v183
    %312 = vmatprep.subr.mxu0 0.0
    %313 = vmatpush1.xpose.msra.mxu0 %v184
    %314 = vmatprep.subr.mxu0 0.0
    %315 = vmatpush1.xpose.msra.mxu0 %v185
    %316 = vmatprep.subr.mxu0 0.0
    %317 = vmatpush1.xpose.msra.mxu0 0.0
    %318 = vmatprep.subr.mxu0 0.0
    %319 = vmatpush1.xpose.msra.mxu0 0.0
    %320 = vmatprep.subr.mxu0 0.0
    %321 = vmatpush1.xpose.msra.mxu0 0.0
    %322 = vmatprep.subr.mxu0 0.0
    %323 = vmatpush1.xpose.msra.mxu0 0.0
    %324 = vmatprep.subr.mxu0 0.0
    %325 = vmatpush1.xpose.msra.mxu0 0.0
    %326 = vmatprep.subr.mxu0 0.0
    %327 = vmatpush1.xpose.msra.mxu0 0.0
    %328 = vmatprep.subr.mxu0 0.0
    %329 = vmatpush1.xpose.msra.mxu0 0.0
    %330 = vmatprep.subr.mxu0 0.0
    %331 = vmatpush1.xpose.msra.mxu0 0.0
    %332 = vmatprep.subr.mxu0 0.0
    %333 = vmatpush1.xpose.msra.mxu0 0.0
    %334 = vmatprep.subr.mxu0 0.0
    %335 = vmatpush1.xpose.msra.mxu0 0.0
    %336 = vmatprep.subr.mxu0 0.0
    %337 = vmatpush1.xpose.msra.mxu0 0.0
    %338 = vmatprep.subr.mxu0 0.0
    %339 = vmatpush1.xpose.msra.mxu0 0.0
    %340 = vmatprep.subr.mxu0 0.0
    %341 = vmatpush1.xpose.msra.mxu0 0.0
    %342 = vmatprep.subr.mxu0 0.0
    %343 = vmatpush1.xpose.msra.mxu0 0.0
    %344 = vmatprep.subr.mxu0 0.0
    %345 = vmatpush1.xpose.msra.mxu0 0.0
    %346 = vmatprep.subr.mxu0 0.0
    %347 = vmatpush1.xpose.msra.mxu0 0.0
    %348 = vmatprep.mubr.f32.mxu0 0.0
    %349 = vmatmul.mubr.f32.gmra.mrb[0].mxu0 %v168
    %v350 = vpop.f32.mrb[0].mxu0
    %v351 = vadd.f32 %v282, %v350
    %v352 = vpop.f32.mrb[0].mxu0
    %353 = vmatprep.mubr.f32.mxu0 0.0
    %354 = vmatmul.mubr.f32.gmra.mrb[0].mxu0 %v169
    %v355 = vpop.f32.mrb[0].mxu0
    %v356 = vadd.f32 %v282, %v355
    %v357 = vpop.f32.mrb[0].mxu0
    %358 = vdwg.mxu0
    %v359 = vadd.f32 %v351, %v269
    %v360 = vadd.f32 %v356, %v274
    %v361 = vld [vmem:[%s6] sm:$0x1]
    %v363 = vlaneseq
    %v364 = vshrl.u32 %v363, 7
    %v365 = vsub.s32 0, %v364
    %v366 = vrot.slane %v361, %v365
    %v368 = vadd.f32 %v359, %v366
    %v369 = vadd.f32 %v360, %v366
    %370 = vst [vmem:[#allocation8] sm:$0xff] %v368
    %371 = vst [vmem:[#allocation8 + $0x8] sm:$0xff] %v369
    // Predicated region
    $region42: #{tpu_custom_call.1} parent=1 // pred_check
      _
    $region43: #{tpu_custom_call.1} parent=1 // pred_check_branch
      %373 = sbr.rel (0) target = $region45
    $region44: #{tpu_custom_call.1} parent=1 // pred_region
      %s375 = ssub.s32 256, 256
      %376 = vsyncadd [#allocation4], %s375
      %s377 = sshll.u32 [#allocation8], 4
      %s378 = int_to_ptr.vmem [resolvable:$true] %s377
      %383 = dma.vmem_to_hbm [thread:$0]  %s378, 256, %s7, [#allocation4], 128, 128, 8
    $region45: #{tpu_custom_call.1} parent=1 // pred_fallthru
      _
    // Predicated region
    $region46: #{tpu_custom_call.1} parent=1 // pred_check
      _
    $region47: #{tpu_custom_call.1} parent=1 // pred_check_branch
      %385 = sbr.rel (0) target = $region49
    $region48: #{tpu_custom_call.1} parent=1 // pred_region
      %386 = dma.done [#allocation4], 256
    $region49: #{tpu_custom_call.1} parent=1 // pred_fallthru
      _
    %387 = vsyncpa [#allocation3], 1
    %388 = vsyncpa [#allocation6], 1
    %389 = vsyncpa [#allocation4], 1

</llo_original>
